<compile_context>
chip_gen: v7x
topology: tpu7x:2x2x1
jax: 0.10.0
libtpu: 0.0.40
codegen_flags: <defaults>
</compile_context>

<pallas_src>
import jax
import jax.numpy as jnp
from jax.experimental import pallas as pl
from jax.experimental.pallas import tpu as pltpu

EPSILON = 1e-4

# VMEM budget for the double-buffered working set (all inputs + output).
# Kept under the 32 MiB default scoped VMEM so it is safe on v5e/v6e/v7x.
_VMEM_BUDGET_BYTES = 24 * 1024 * 1024


def _choose_tile_hw(hw, sum_c_in, c_out, dtype_bytes):
    """Largest spatial tile (multiple of 128 that divides hw) within budget."""
    bytes_per_lane = 2 * (sum_c_in + c_out) * dtype_bytes  # 2x: double buffer
    max_lanes = max(_VMEM_BUDGET_BYTES // max(bytes_per_lane, 1), 1)
    if hw <= max_lanes:
        return hw  # whole spatial slab fits comfortably -> single tile
    if hw % 128 != 0:
        # TODO(synk): non-128-aligned spatial extents fall back to full-slab
        # blocks (relies on the "full array dim" exception of the (8,128) rule).
        return hw
    m = hw // 128
    best = 1
    for d in range(1, m + 1):
        if m % d == 0 and 128 * d <= max_lanes:
            best = d
    return 128 * best


def _make_concat_bifpn_kernel(n_inputs, channels, eps):
    """Build a kernel for `n_inputs` (2 or 3) weighted inputs."""

    def kernel(w_ref, *refs):
        # refs = (x0_ref, ..., x{n-1}_ref, o_ref); x_ref block = (1, C_i, T_HW)
        x_refs = refs[:n_inputs]
        o_ref = refs[n_inputs]

        # Normalize the fusion weights once (scalar path, SMEM, f32).
        s = w_ref[0]
        for i in range(1, n_inputs):
            s = s + w_ref[i]
        inv = 1.0 / (s + eps)

        # One broadcast-mul + one store per input block; concat along sublanes.
        # (Typical BiFPN channel counts of 64/128/256 keep `off` sublane-aligned.)
        off = 0
        for i in range(n_inputs):
            c = channels[i]
            scale = w_ref[i] * inv  # scalar, f32
            o_ref[:, off:off + c, :] = (scale * x_refs[i][...]).astype(o_ref.dtype)
            off += c

    return kernel


def concat_bifpn(xs, w1, w2, dimension=1):
    """Pallas implementation of Concat_BIFPN.forward.

    xs: list of 2 or 3 arrays with shape (N, C_i, H, W) (NCHW).
    w1: (2,) f32 parameter, w2: (3,) f32 parameter.
    """
    assert dimension == 1, "only channel concat (dim=1) is implemented"
    n = len(xs)
    assert n in (2, 3), "Concat_BIFPN supports 2 or 3 inputs"
    w = (w1 if n == 2 else w2).astype(jnp.float32)

    N, _, H, W = xs[0].shape
    HW = H * W
    cs = tuple(int(x.shape[1]) for x in xs)
    c_out = sum(cs)
    dtype = xs[0].dtype
    dtype_bytes = jnp.dtype(dtype).itemsize

    t_hw = _choose_tile_hw(HW, sum(cs), c_out, dtype_bytes)
    n_tiles = HW // t_hw

    xs_flat = [x.reshape(N, x.shape[1], HW) for x in xs]

    kernel = _make_concat_bifpn_kernel(n, cs, EPSILON)

    total_elems = N * c_out * HW
    cost = pl.CostEstimate(
        flops=total_elems,                              # one mul per element
        transcendentals=0,
        bytes_accessed=2 * total_elems * dtype_bytes,   # read + write
    )

    out = pl.pallas_call(
        kernel,
        out_shape=jax.ShapeDtypeStruct((N, c_out, HW), dtype),
        grid_spec=pltpu.PrefetchScalarGridSpec(
            num_scalar_prefetch=1,                 # weight vector -> SMEM
            grid=(N, n_tiles),                     # (batch, spatial tile)
            in_specs=[
                pl.BlockSpec((1, c, t_hw), lambda b, t, w_ref: (b, 0, t))
                for c in cs
            ],
            out_specs=pl.BlockSpec((1, c_out, t_hw),
                                   lambda b, t, w_ref: (b, 0, t)),
        ),
        compiler_params=pltpu.CompilerParams(
            dimension_semantics=("parallel", "parallel"),
            vmem_limit_bytes=32 * 1024 * 1024,
        ),
        cost_estimate=cost,
    )(w, *xs_flat)

    return out.reshape(N, c_out, H, W)


def concat_bifpn_reference(xs, w1, w2):
    """Pure-JAX reference matching the PyTorch module exactly."""
    n = len(xs)
    w = w1 if n == 2 else w2
    weight = w / (jnp.sum(w, axis=0) + EPSILON)
    scaled = [weight[i] * xs[i] for i in range(n)]
    return jnp.concatenate(scaled, axis=1)


if __name__ == "__main__":
    key = jax.random.PRNGKey(0)
    k0, k1, k2 = jax.random.split(key, 3)

    # Small NCHW inputs consistent with the module's usage.
    N, C, H, W = 2, 4, 16, 16
    x0 = jax.random.normal(k0, (N, C, H, W), dtype=jnp.float32)
    x1 = jax.random.normal(k1, (N, C, H, W), dtype=jnp.float32)
    x2 = jax.random.normal(k2, (N, C, H, W), dtype=jnp.float32)

    # Deterministic parameter init, exactly as in __init__ (ones).
    w1 = jnp.ones((2,), dtype=jnp.float32)
    w2 = jnp.ones((3,), dtype=jnp.float32)

    # --- 2-input path ---
    out2 = concat_bifpn([x0, x1], w1, w2)
    out2 = jax.block_until_ready(out2)
    ref2 = concat_bifpn_reference([x0, x1], w1, w2)
    assert out2.shape == (N, 2 * C, H, W)
    assert jnp.allclose(out2, ref2, atol=1e-6, rtol=1e-6)

    # --- 3-input path ---
    out3 = concat_bifpn([x0, x1, x2], w1, w2)
    out3 = jax.block_until_ready(out3)
    ref3 = concat_bifpn_reference([x0, x1, x2], w1, w2)
    assert out3.shape == (N, 3 * C, H, W)
    assert jnp.allclose(out3, ref3, atol=1e-6, rtol=1e-6)

    print("KERNEL_OK")
</pallas_src>

<mosaic_0001>
module attributes {stable_mosaic.version = 11 : i64} {
  func.func @kernel(%arg0: i32, %arg1: i32, %arg2: memref<2xf32, #tpu.memory_space<smem>>, %arg3: memref<1x4x256xf32, #tpu.memory_space<vmem>>, %arg4: memref<1x4x256xf32, #tpu.memory_space<vmem>>, %arg5: memref<1x8x256xf32, #tpu.memory_space<vmem>>) attributes {dimension_semantics = [#tpu.dimension_semantics<parallel>, #tpu.dimension_semantics<parallel>], iteration_bounds = array<i64: 2, 1>, scalar_prefetch = 1 : i64, scratch_operands = 0 : i64, tpu.core_type = #tpu.core_type<tc>, window_params = [{transform_indices = @transform_0, window_bounds = array<i64: 1, 4, 256>}, {transform_indices = @transform_1, window_bounds = array<i64: 1, 4, 256>}, {transform_indices = @transform_2, window_bounds = array<i64: 1, 8, 256>}]} {
    %c0 = arith.constant 0 : index
    %0 = memref.load %arg2[%c0] : memref<2xf32, #tpu.memory_space<smem>>
    %c1 = arith.constant 1 : index
    %1 = memref.load %arg2[%c1] : memref<2xf32, #tpu.memory_space<smem>>
    %2 = arith.addf %0, %1 : f32
    %cst = arith.constant 9.99999974E-5 : f32
    %3 = arith.addf %2, %cst : f32
    %cst_0 = arith.constant 1.000000e+00 : f32
    %4 = arith.divf %cst_0, %3 : f32
    %c0_1 = arith.constant 0 : index
    %5 = memref.load %arg2[%c0_1] : memref<2xf32, #tpu.memory_space<smem>>
    %6 = arith.mulf %5, %4 : f32
    %c0_2 = arith.constant 0 : index
    %c0_3 = arith.constant 0 : index
    %c0_4 = arith.constant 0 : index
    %7 = vector.load %arg3[%c0_2, %c0_3, %c0_4] : memref<1x4x256xf32, #tpu.memory_space<vmem>>, vector<1x4x256xf32>
    %8 = vector.broadcast %6 : f32 to vector<1x4x256xf32>
    %9 = arith.mulf %8, %7 : vector<1x4x256xf32>
    %c0_5 = arith.constant 0 : index
    %c0_6 = arith.constant 0 : index
    %c0_7 = arith.constant 0 : index
    %10 = vector.load %arg5[%c0_5, %c0_6, %c0_7] : memref<1x8x256xf32, #tpu.memory_space<vmem>>, vector<1x4x256xf32>
    tpu.vector_store %arg5[%c0_5, %c0_6, %c0_7], %9 {strides = array<i32>} : memref<1x8x256xf32, #tpu.memory_space<vmem>>, vector<1x4x256xf32>,
    %c1_8 = arith.constant 1 : index
    %11 = memref.load %arg2[%c1_8] : memref<2xf32, #tpu.memory_space<smem>>
    %12 = arith.mulf %11, %4 : f32
    %c0_9 = arith.constant 0 : index
    %c0_10 = arith.constant 0 : index
    %c0_11 = arith.constant 0 : index
    %13 = vector.load %arg4[%c0_9, %c0_10, %c0_11] : memref<1x4x256xf32, #tpu.memory_space<vmem>>, vector<1x4x256xf32>
    %14 = vector.broadcast %12 : f32 to vector<1x4x256xf32>
    %15 = arith.mulf %14, %13 : vector<1x4x256xf32>
    %c0_12 = arith.constant 0 : index
    %c4 = arith.constant 4 : index
    %c0_13 = arith.constant 0 : index
    %16 = vector.load %arg5[%c0_12, %c4, %c0_13] : memref<1x8x256xf32, #tpu.memory_space<vmem>>, vector<1x4x256xf32>
    tpu.vector_store %arg5[%c0_12, %c4, %c0_13], %15 {strides = array<i32>} : memref<1x8x256xf32, #tpu.memory_space<vmem>>, vector<1x4x256xf32>,
    return
  }
  func.func @transform_0(%arg0: i32, %arg1: i32, %arg2: memref<2xf32, #tpu.memory_space<smem>>) -> (i32, i32, i32) {
    %c0_i32 = arith.constant 0 : i32
    %c0_i32_0 = arith.constant 0 : i32
    return %arg0, %c0_i32, %arg1 : i32, i32, i32
  }
  func.func @transform_1(%arg0: i32, %arg1: i32, %arg2: memref<2xf32, #tpu.memory_space<smem>>) -> (i32, i32, i32) {
    %c0_i32 = arith.constant 0 : i32
    %c0_i32_0 = arith.constant 0 : i32
    return %arg0, %c0_i32, %arg1 : i32, i32, i32
  }
  func.func @transform_2(%arg0: i32, %arg1: i32, %arg2: memref<2xf32, #tpu.memory_space<smem>>) -> (i32, i32, i32) {
    %c0_i32 = arith.constant 0 : i32
    %c0_i32_0 = arith.constant 0 : i32
    return %arg0, %c0_i32, %arg1 : i32, i32, i32
  }
}

</mosaic_0001>

<llo_original>
// kernel: tpu_custom_call.1
$region0: #{tpu_custom_call.1}
  #allocation0 [shape = 'u32[]', space=smem, size = 0x4, offset = 0x4, fixed_abs, tag = 'smem constant byte address 0x4 - core index']
  #allocation1 [shape = 'u32[144,128]{1,0:T(1,128)}', space=vmem, size = 0x12000, scoped, tag = 'internal scratch']
  #allocation2 [shape = 's32[1]{0}', space=sflag, size = 0x4, scoped, tag = 'scoped memory for tpu_custom_call.1']
  #allocation3 [shape = 'u8[512]{0}', space=smem, size = 0x200, scoped, tag = 'prefetched SMEM operand 0']
  %s0 = inlined_call_operand.hbm [shape: f32[2], index: 0, kind: input, shape index: {}]
  %s1 = inlined_call_operand.hbm [shape: f32[2,4,256], index: 1, kind: input, shape index: {}]
  %s2 = inlined_call_operand.hbm [shape: f32[2,4,256], index: 2, kind: input, shape index: {}]
  %s3 = inlined_call_operand.hbm [shape: f32[2,8,256], index: 3, kind: output, shape index: {}]
  %s4 = sld [smem:[#allocation0]]
  $region49: #{tpu_custom_call.1} parent=0
    _
  %s6 = ssub.s32 1, %s4
  %s7 = scalar_select 0, %s6, %s4
  %9 = dma.hbm_to_smem %s0, 16, [#allocation3], [#allocation2]
  %10 = dma.done [#allocation2], 16
  %11 = sfence
  $region1: #{tpu_custom_call.1} parent=0
    #allocation4 [shape = 'u8[8192]{0}', space=vmem, size = 0x2000, scoped, tag = 'input window, operand 1']
    #allocation5 [shape = 's32[2]{0}', space=sflag, size = 0x8, scoped, tag = 'scoped memory for tpu_custom_call.1']
    #allocation6 [shape = 's32[2]{0}', space=sflag, size = 0x8, scoped, tag = 'scoped memory for tpu_custom_call.1']
    #allocation7 [shape = 'u8[8192]{0}', space=vmem, size = 0x2000, scoped, tag = 'input window, operand 2']
    #allocation8 [shape = 's32[2]{0}', space=sflag, size = 0x8, scoped, tag = 'scoped memory for tpu_custom_call.1']
    #allocation9 [shape = 'u8[16384]{0}', space=vmem, size = 0x4000, scoped, tag = 'output window, operand 0']
    %12 = vsyncpa [#allocation5], 0
    %s13 = scalar_lea.sflag [#allocation5], 1
    %14 = vsyncpa %s13, 0
    %15 = vsyncpa [#allocation8], 0
    %s16 = scalar_lea.sflag [#allocation8], 1
    %17 = vsyncpa %s16, 0
    %18 = vsyncpa [#allocation6], 0
    %s19 = scalar_lea.sflag [#allocation6], 1
    %20 = vsyncpa %s19, 0
    loop: start=0, step=1, limit=4
    $region2: #{tpu_custom_call.1} parent=1 // loop_pre_header
      _
    $region3: #{tpu_custom_call.1} parent=1 // loop_header
      %s22 = sphi 0, %s26
      %p23 = scmp.ge.s32.totalorder %s22, 4
      %s29 = sphi 0, %s41
      %s30 = sphi 0, %s37
      %s31 = sphi 0, %s29
      %s32 = sphi 0, %s30
      %s33 = sphi 0, %s31
      %s34 = sphi 0, %s32
      %s46 = sphi 0, %s48
      %s49 = sphi 0, %s46
      %s50 = sphi 0, %s49
      %s66 = sphi 0, %s50
      %s74 = sphi 0, %s76
      %s77 = sphi 0, %s74
      %s78 = sphi 0, %s77
      %s94 = sphi 0, %s78
      %s102 = sphi 0, %s104
      %s105 = sphi 0, %s102
      %s106 = sphi 0, %s105
      %s122 = sphi 0, %s106
    $region4: #{tpu_custom_call.1} parent=1 // loop_header_branch
      %25 = sbr.rel (%p23) target = $region8
    $region5: #{tpu_custom_call.1} parent=1 // loop_body
      %s27 = ssub.s32 %s22, 1
      %s28 = ssub.s32 %s22, 2
      %s35 = sadd.s32 1, %s30
      %p36 = scmp.ge.s32.totalorder %s35, 1
      %s37 = scalar_select %p36, 0, %s35
      %s38 = sadd.s32 1, %s29
      %s39 = scalar_select %p36, %s38, %s29
      %p40 = scmp.ge.s32.totalorder %s39, 2
      %s41 = scalar_select %p40, 0, %s39
      %s42 = ssub.s32 %s29, %s41
      %s43 = ssub.s32 %s30, %s37
      %s44 = sor.u32 %s42, %s43
      %p45 = scmp.eq.s32.totalorder %s44, 0
      %s47 = sadd.s32 %s46, 1
      %s48 = scalar_select %p45, %s46, %s47
      %p51 = pneg %p45
      %p52 = scmp.eq.s32.totalorder %s22, 1
      %p53 = por %p51, %p52
      %p54 = scmp.ne.s32.totalorder %s46, %s49
      %p55 = scmp.eq.s32.totalorder %s22, 0
      %p56 = por %p54, %p55
      %p57 = scmp.ne.s32.totalorder %s46, %s49
      %p58 = scmp.eq.s32.totalorder %s27, 1
      %p59 = por %p57, %p58
      %p60 = scmp.ne.s32.totalorder %s49, %s50
      %p61 = scmp.eq.s32.totalorder %s27, 0
      %p62 = por %p60, %p61
      %p63 = scmp.ne.s32.totalorder %s49, %s50
      %p64 = scmp.eq.s32.totalorder %s28, 1
      %p65 = por %p63, %p64
      %p67 = scmp.ne.s32.totalorder %s50, %s66
      %p68 = scmp.eq.s32.totalorder %s28, 0
      %p69 = por %p67, %p68
      %s70 = ssub.s32 %s29, %s41
      %s71 = ssub.s32 %s30, %s37
      %s72 = sor.u32 %s70, %s71
      %p73 = scmp.eq.s32.totalorder %s72, 0
      %s75 = sadd.s32 %s74, 1
      %s76 = scalar_select %p73, %s74, %s75
      %p79 = pneg %p73
      %p80 = scmp.eq.s32.totalorder %s22, 1
      %p81 = por %p79, %p80
      %p82 = scmp.ne.s32.totalorder %s74, %s77
      %p83 = scmp.eq.s32.totalorder %s22, 0
      %p84 = por %p82, %p83
      %p85 = scmp.ne.s32.totalorder %s74, %s77
      %p86 = scmp.eq.s32.totalorder %s27, 1
      %p87 = por %p85, %p86
      %p88 = scmp.ne.s32.totalorder %s77, %s78
      %p89 = scmp.eq.s32.totalorder %s27, 0
      %p90 = por %p88, %p89
      %p91 = scmp.ne.s32.totalorder %s77, %s78
      %p92 = scmp.eq.s32.totalorder %s28, 1
      %p93 = por %p91, %p92
      %p95 = scmp.ne.s32.totalorder %s78, %s94
      %p96 = scmp.eq.s32.totalorder %s28, 0
      %p97 = por %p95, %p96
      %s98 = ssub.s32 %s29, %s41
      %s99 = ssub.s32 %s30, %s37
      %s100 = sor.u32 %s98, %s99
      %p101 = scmp.eq.s32.totalorder %s100, 0
      %s103 = sadd.s32 %s102, 1
      %s104 = scalar_select %p101, %s102, %s103
      %p107 = pneg %p101
      %p108 = scmp.eq.s32.totalorder %s22, 1
      %p109 = por %p107, %p108
      %p110 = scmp.ne.s32.totalorder %s102, %s105
      %p111 = scmp.eq.s32.totalorder %s22, 0
      %p112 = por %p110, %p111
      %p113 = scmp.ne.s32.totalorder %s102, %s105
      %p114 = scmp.eq.s32.totalorder %s27, 1
      %p115 = por %p113, %p114
      %p116 = scmp.ne.s32.totalorder %s105, %s106
      %p117 = scmp.eq.s32.totalorder %s27, 0
      %p118 = por %p116, %p117
      %p119 = scmp.ne.s32.totalorder %s105, %s106
      %p120 = scmp.eq.s32.totalorder %s28, 1
      %p121 = por %p119, %p120
      %p123 = scmp.ne.s32.totalorder %s106, %s122
      %p124 = scmp.eq.s32.totalorder %s28, 0
      %p125 = por %p123, %p124
      %p126 = scmp.le.s32.totalorder 1, %s22
      %p127 = scmp.lt.s32.totalorder %s22, 3
      %p128 = pnand %p126, %p127
      %p129 = pneg %p128
      // Predicated region
      $region9: #{tpu_custom_call.1} parent=5 // pred_check
        _
      $region10: #{tpu_custom_call.1} parent=5 // pred_check_branch
        %131 = sbr.rel (%p128) target = $region12
      $region11: #{tpu_custom_call.1} parent=5 // pred_region
        %s132 = ssub.s32 %s22, 1
      $region12: #{tpu_custom_call.1} parent=5 // pred_fallthru
        _
      %p133 = scmp.lt.s32.totalorder %s22, 2
      // Predicated region
      $region13: #{tpu_custom_call.1} parent=5 // pred_check
        %p134 = pneg %p133
      $region14: #{tpu_custom_call.1} parent=5 // pred_check_branch
        %136 = sbr.rel (%p134) target = $region16
      $region15: #{tpu_custom_call.1} parent=5 // pred_region
        // Predicated region
        $region17: #{tpu_custom_call.1} parent=15 // pred_check
          %p137 = pneg %p56
        $region18: #{tpu_custom_call.1} parent=15 // pred_check_branch
          %139 = sbr.rel (%p137) target = $region20
        $region19: #{tpu_custom_call.1} parent=15 // pred_region
          %s140 = sand.u32 %s46, 1
          %s141 = scalar_lea.sflag [#allocation5], %s140
          %s142 = sand.u32 %s46, 1
          %s143 = smul.addr %s142, 8
          %s144 = scalar_lea.vmem [#allocation4], %s143
          %s145 = smul.u32 2, %s30
          %s147 = ssub.s32 128, 128
          %148 = vsyncadd %s141, %s147
          %s149 = smul.addr %s29, 2
          %s150 = sadd.s32 %s145, %s149
          %s151 = smul.addr %s150, 64
          %s152 = scalar_lea.hbm %s1, %s151
          %s154 = sshll.u32 %s144, 4
          %s155 = int_to_ptr.vmem [resolvable:$true] %s154
          %157 = dma.hbm_to_vmem [thread:$0]  %s152, 128, %s155, %s141
        $region20: #{tpu_custom_call.1} parent=15 // pred_fallthru
          _
        // Predicated region
        $region21: #{tpu_custom_call.1} parent=15 // pred_check
          %p158 = pneg %p84
        $region22: #{tpu_custom_call.1} parent=15 // pred_check_branch
          %160 = sbr.rel (%p158) target = $region24
        $region23: #{tpu_custom_call.1} parent=15 // pred_region
          %s161 = sand.u32 %s74, 1
          %s162 = scalar_lea.sflag [#allocation8], %s161
          %s163 = sand.u32 %s74, 1
          %s164 = smul.addr %s163, 8
          %s165 = scalar_lea.vmem [#allocation7], %s164
          %s166 = smul.u32 2, %s30
          %s168 = ssub.s32 128, 128
          %169 = vsyncadd %s162, %s168
          %s170 = smul.addr %s29, 2
          %s171 = sadd.s32 %s166, %s170
          %s172 = smul.addr %s171, 64
          %s173 = scalar_lea.hbm %s2, %s172
          %s175 = sshll.u32 %s165, 4
          %s176 = int_to_ptr.vmem [resolvable:$true] %s175
          %178 = dma.hbm_to_vmem [thread:$0]  %s173, 128, %s176, %s162
        $region24: #{tpu_custom_call.1} parent=15 // pred_fallthru
          _
      $region16: #{tpu_custom_call.1} parent=5 // pred_fallthru
        _
      %p179 = scmp.le.s32.totalorder 1, %s22
      %p180 = scmp.lt.s32.totalorder %s22, 3
      %p181 = pnand %p179, %p180
      %p182 = pneg %p181
      // Predicated region
      $region25: #{tpu_custom_call.1} parent=5 // pred_check
        _
      $region26: #{tpu_custom_call.1} parent=5 // pred_check_branch
        %184 = sbr.rel (%p181) target = $region28
      $region27: #{tpu_custom_call.1} parent=5 // pred_region
        %s185 = ssub.s32 %s22, 1
        %s186 = sand.u32 %s49, 1
        %s187 = scalar_lea.sflag [#allocation5], %s186
        %s188 = sand.u32 %s49, 1
        %s189 = smul.addr %s188, 8
        %s190 = scalar_lea.vmem [#allocation4], %s189
        // Predicated region
        $region29: #{tpu_custom_call.1} parent=27 // pred_check
          %p191 = pneg %p62
        $region30: #{tpu_custom_call.1} parent=27 // pred_check_branch
          %193 = sbr.rel (%p191) target = $region32
        $region31: #{tpu_custom_call.1} parent=27 // pred_region
          %194 = dma.done %s187, 128
        $region32: #{tpu_custom_call.1} parent=27 // pred_fallthru
          _
        %s195 = sand.u32 %s77, 1
        %s196 = scalar_lea.sflag [#allocation8], %s195
        %s197 = sand.u32 %s77, 1
        %s198 = smul.addr %s197, 8
        %s199 = scalar_lea.vmem [#allocation7], %s198
        // Predicated region
        $region33: #{tpu_custom_call.1} parent=27 // pred_check
          %p200 = pneg %p90
        $region34: #{tpu_custom_call.1} parent=27 // pred_check_branch
          %202 = sbr.rel (%p200) target = $region36
        $region35: #{tpu_custom_call.1} parent=27 // pred_region
          %203 = dma.done %s196, 128
        $region36: #{tpu_custom_call.1} parent=27 // pred_fallthru
          _
        %s204 = sand.u32 %s49, 1
        %s205 = scalar_lea.sflag [#allocation5], %s204
        %s206 = sand.u32 %s49, 1
        %s207 = smul.addr %s206, 8
        %s208 = scalar_lea.vmem [#allocation4], %s207
        %p209 = pneg %p62
        %p210 = pneg %p59
        %s211 = sand.u32 %s77, 1
        %s212 = scalar_lea.sflag [#allocation8], %s211
        %s213 = sand.u32 %s77, 1
        %s214 = smul.addr %s213, 8
        %s215 = scalar_lea.vmem [#allocation7], %s214
        %p216 = pneg %p90
        %p217 = pneg %p87
        %p218 = pneg %p118
        %p219 = pneg %p115
        %s220 = sand.u32 %s105, 1
        %s221 = scalar_lea.sflag [#allocation6], %s220
        %s222 = sand.u32 %s105, 1
        %s223 = smul.addr %s222, 16
        %s224 = scalar_lea.vmem [#allocation9], %s223
        %s225 = smul.u32 2, %s32
        %s226 = smul.u32 2, %s32
        %s227 = smul.u32 2, %s32
        %s228 = sld [smem:[#allocation3]]
        %s229 = sld [smem:[#allocation3 + $0x1]]
        %s230 = sadd.f32 %s228, %s229
        %s231 = sadd.f32 %s230, 0.0001
        %v232 = vstv %s231
        %v233 = vrcp.pop %v232
        %s234 = vtos %v233
        %s235 = smul.f32 %s228, %s234
        %v236 = vld [vmem:[%s190] sm:$0xff]
        %v237 = vstv %s235
        %v238 = vmul.f32 %v237, %v236
        %v240 = vcombine.high %v238, %v238
        %242 = vst [vmem:[%s224] sm:$0xf] %v238
        %243 = vst [vmem:[%s224 + $0x8] sm:$0xf] %v240
        %s244 = sld [smem:[#allocation3 + $0x1]]
        %s245 = smul.f32 %s244, %s234
        %v246 = vld [vmem:[%s199] sm:$0xff]
        %v247 = vstv %s245
        %v248 = vmul.f32 %v247, %v246
        %v250 = vcombine.low %v248, %v248
        %252 = vst [vmem:[%s224] sm:$0xf0] %v250
        %253 = vst [vmem:[%s224 + $0x8] sm:$0xf0] %v248
        %s254 = sand.u32 %s105, 1
        %s255 = scalar_lea.sflag [#allocation6], %s254
        %s256 = sand.u32 %s105, 1
        %s257 = smul.addr %s256, 16
        %s258 = scalar_lea.vmem [#allocation9], %s257
        // Predicated region
        $region37: #{tpu_custom_call.1} parent=27 // pred_check
          %p259 = pneg %p115
        $region38: #{tpu_custom_call.1} parent=27 // pred_check_branch
          %261 = sbr.rel (%p259) target = $region40
        $region39: #{tpu_custom_call.1} parent=27 // pred_region
          %s262 = smul.u32 2, %s32
          %s264 = ssub.s32 256, 256
          %265 = vsyncadd %s255, %s264
          %s266 = smul.addr %s31, 2
          %s267 = sadd.s32 %s262, %s266
          %s268 = smul.addr %s267, 128
          %s269 = scalar_lea.hbm %s3, %s268
          %s271 = sshll.u32 %s258, 4
          %s272 = int_to_ptr.vmem [resolvable:$true] %s271
          %274 = dma.vmem_to_hbm [thread:$0]  %s272, 256, %s269, %s255
        $region40: #{tpu_custom_call.1} parent=27 // pred_fallthru
          _
      $region28: #{tpu_custom_call.1} parent=5 // pred_fallthru
        _
      %p275 = scmp.le.s32.totalorder 2, %s22
      // Predicated region
      $region41: #{tpu_custom_call.1} parent=5 // pred_check
        %p276 = pneg %p275
      $region42: #{tpu_custom_call.1} parent=5 // pred_check_branch
        %278 = sbr.rel (%p276) target = $region44
      $region43: #{tpu_custom_call.1} parent=5 // pred_region
        %s279 = ssub.s32 %s22, 2
        // Predicated region
        $region45: #{tpu_custom_call.1} parent=43 // pred_check
          %p280 = pneg %p121
        $region46: #{tpu_custom_call.1} parent=43 // pred_check_branch
          %282 = sbr.rel (%p280) target = $region48
        $region47: #{tpu_custom_call.1} parent=43 // pred_region
          %s283 = sand.u32 %s106, 1
          %s284 = scalar_lea.sflag [#allocation6], %s283
          %s285 = sand.u32 %s106, 1
          %s286 = smul.addr %s285, 16
          %s287 = scalar_lea.vmem [#allocation9], %s286
          %288 = dma.done %s284, 256
        $region48: #{tpu_custom_call.1} parent=43 // pred_fallthru
          _
      $region44: #{tpu_custom_call.1} parent=5 // pred_fallthru
        _
    $region6: #{tpu_custom_call.1} parent=1 // loop_footer
      %s26 = sadd.s32 1, %s22
    $region7: #{tpu_custom_call.1} parent=1 // loop_footer_branch
      %21 = sbr.rel target = $region3
    $region8: #{tpu_custom_call.1} parent=1 // loop_exit
      _
    %289 = vsyncpa [#allocation5], 1
    %s290 = scalar_lea.sflag [#allocation5], 1
    %291 = vsyncpa %s290, 1
    %292 = vsyncpa [#allocation8], 1
    %s293 = scalar_lea.sflag [#allocation8], 1
    %294 = vsyncpa %s293, 1
    %295 = vsyncpa [#allocation6], 1
    %s296 = scalar_lea.sflag [#allocation6], 1
    %297 = vsyncpa %s296, 1

</llo_original>
